<compile_context>
chip_gen: v5e
topology: v5e:2x2
jax: 0.10.0
libtpu: 0.0.40
codegen_flags: <defaults>
</compile_context>

<pallas_src>
import functools

import jax
import jax.numpy as jnp
from jax.experimental import pallas as pl
from jax.experimental.pallas import tpu as pltpu


def _simple_nn_kernel(hidden, x_ref, w1_ref, b1_ref, w2_ref, b2_ref, o_ref):
    # x tile: (block_rows, lane_width) f32, batch elements spread over
    # sublanes + lanes (lane-dense layout).
    x = x_ref[...]
    acc = jnp.zeros_like(x)
    # hidden is a small static constant -> fully unrolled; each iteration is a
    # handful of VPU FMAs/max on the whole tile, with scalar weights read from
    # SMEM and broadcast (splat) into vregs. No MXU, no XLU needed.
    for j in range(hidden):
        h = jnp.maximum(x * w1_ref[j] + b1_ref[j], 0.0)
        acc = acc + h * w2_ref[j]
    o_ref[...] = acc + b2_ref[0]


def simple_nn_forward(x, w1, b1, w2, b2, *, lane_width=512, block_rows=64,
                      min_pallas_elems=1024):
    """Forward pass of SimpleNN: relu(x @ W1^T + b1) @ W2^T + b2.

    Args (PyTorch nn.Linear layouts):
      x  : (N, 1) float32
      w1 : (H, 1), b1 : (H,)   -- nn.Linear(1, H)
      w2 : (1, H), b2 : (1,)   -- nn.Linear(H, 1)
    Returns (N, 1) float32.
    """
    N = x.shape[0]
    H = w1.shape[0]
    w1f = w1.reshape(H).astype(jnp.float32)
    b1f = b1.reshape(H).astype(jnp.float32)
    w2f = w2.reshape(H).astype(jnp.float32)
    b2f = b2.reshape(1).astype(jnp.float32)
    xf = x.astype(jnp.float32)

    # Tiny batches: custom-call + per-grid-step overhead dominates; let XLA's
    # fused elementwise handle it.
    if N < min_pallas_elems:
        h = jnp.maximum(xf @ w1f[None, :] + b1f[None, :], 0.0)
        return h @ w2f[:, None] + b2f[None, :]

    # Pad N so the lane-dense reshape and the grid tiling divide exactly; the
    # padded tail is computed (garbage-in, garbage-out) and sliced off below.
    tile = block_rows * lane_width            # elements per grid step
    n_pad = pl.cdiv(N, tile) * tile
    x_lanes = jnp.pad(xf.reshape(N), (0, n_pad - N)).reshape(
        n_pad // lane_width, lane_width)

    kernel = functools.partial(_simple_nn_kernel, H)
    out_lanes = pl.pallas_call(
        kernel,
        out_shape=jax.ShapeDtypeStruct(x_lanes.shape, jnp.float32),
        grid=(n_pad // tile,),
        in_specs=[
            # Lane-dense x tiles, (8,128)-aligned, auto double-buffered.
            pl.BlockSpec((block_rows, lane_width), lambda i: (i, 0)),
            # Weights/biases: whole (tiny) arrays resident in SMEM, no re-DMA
            # across grid steps, read as scalars inside the unrolled loop.
            pl.BlockSpec(memory_space=pltpu.MemorySpace.SMEM),
            pl.BlockSpec(memory_space=pltpu.MemorySpace.SMEM),
            pl.BlockSpec(memory_space=pltpu.MemorySpace.SMEM),
            pl.BlockSpec(memory_space=pltpu.MemorySpace.SMEM),
        ],
        out_specs=pl.BlockSpec((block_rows, lane_width), lambda i: (i, 0)),
        compiler_params=pltpu.CompilerParams(
            # Batch axis is embarrassingly parallel -> megacore sharding on v7x,
            # harmless no-op on v5e/v6e.
            dimension_semantics=("parallel",)),
    )(x_lanes, w1f, b1f, w2f, b2f)

    return out_lanes.reshape(n_pad)[:N].reshape(N, 1)


def init_params(key, hidden_neurons):
    # Deterministic init mimicking nn.Linear's uniform(-1/sqrt(fan_in), +...),
    # in native PyTorch layouts.
    k1, k2, k3, k4 = jax.random.split(key, 4)
    bound1 = 1.0                                      # fan_in = 1
    bound2 = 1.0 / jnp.sqrt(float(hidden_neurons))
    w1 = jax.random.uniform(k1, (hidden_neurons, 1), jnp.float32, -bound1, bound1)
    b1 = jax.random.uniform(k2, (hidden_neurons,), jnp.float32, -bound1, bound1)
    w2 = jax.random.uniform(k3, (1, hidden_neurons), jnp.float32, -bound2, bound2)
    b2 = jax.random.uniform(k4, (1,), jnp.float32, -bound2, bound2)
    return w1, b1, w2, b2


if __name__ == "__main__":
    key = jax.random.PRNGKey(0)
    hidden_neurons = 32
    batch = 2000          # not a multiple of 128: exercises the padding path

    kx, kp = jax.random.split(key)
    x = jax.random.normal(kx, (batch, 1), jnp.float32)
    w1, b1, w2, b2 = init_params(kp, hidden_neurons)

    # Small tiles for the demo -> padded to 2048 elems, grid of 2 steps.
    out = simple_nn_forward(x, w1, b1, w2, b2, lane_width=128, block_rows=8)
    out = jax.block_until_ready(out)

    # Reference in plain JAX (same semantics as the PyTorch forward).
    ref = jnp.maximum(x @ w1.T + b1[None, :], 0.0) @ w2.T + b2[None, :]
    assert out.shape == (batch, 1)
    assert jnp.allclose(out, ref, atol=1e-4, rtol=1e-5)

    print("KERNEL_OK")
</pallas_src>

<mosaic_0001>
module attributes {stable_mosaic.version = 11 : i64} {
  func.func @_simple_nn_kernel(%arg0: i32, %arg1: memref<8x128xf32, #tpu.memory_space<vmem>>, %arg2: memref<32xf32, #tpu.memory_space<smem>>, %arg3: memref<32xf32, #tpu.memory_space<smem>>, %arg4: memref<32xf32, #tpu.memory_space<smem>>, %arg5: memref<1xf32, #tpu.memory_space<smem>>, %arg6: memref<8x128xf32, #tpu.memory_space<vmem>>) attributes {dimension_semantics = [#tpu.dimension_semantics<parallel>], iteration_bounds = array<i64: 2>, scalar_prefetch = 0 : i64, scratch_operands = 0 : i64, tpu.core_type = #tpu.core_type<tc>, window_params = [{transform_indices = @transform_0, window_bounds = array<i64: 8, 128>}, {transform_indices = @transform_1, window_bounds = array<i64: 32>}, {transform_indices = @transform_2, window_bounds = array<i64: 32>}, {transform_indices = @transform_3, window_bounds = array<i64: 32>}, {transform_indices = @transform_4, window_bounds = array<i64: 1>}, {transform_indices = @transform_5, window_bounds = array<i64: 8, 128>}]} {
    %c0 = arith.constant 0 : index
    %c0_0 = arith.constant 0 : index
    %0 = vector.load %arg1[%c0, %c0_0] : memref<8x128xf32, #tpu.memory_space<vmem>>, vector<8x128xf32>
    %cst = arith.constant 0.000000e+00 : f32
    %1 = vector.broadcast %cst : f32 to vector<8x128xf32>
    %c0_1 = arith.constant 0 : index
    %2 = memref.load %arg2[%c0_1] : memref<32xf32, #tpu.memory_space<smem>>
    %3 = vector.broadcast %2 : f32 to vector<8x128xf32>
    %4 = arith.mulf %0, %3 : vector<8x128xf32>
    %c0_2 = arith.constant 0 : index
    %5 = memref.load %arg3[%c0_2] : memref<32xf32, #tpu.memory_space<smem>>
    %6 = vector.broadcast %5 : f32 to vector<8x128xf32>
    %7 = arith.addf %4, %6 : vector<8x128xf32>
    %cst_3 = arith.constant 0.000000e+00 : f32
    %8 = vector.broadcast %cst_3 : f32 to vector<8x128xf32>
    %9 = arith.maximumf %7, %8 : vector<8x128xf32>
    %c0_4 = arith.constant 0 : index
    %10 = memref.load %arg4[%c0_4] : memref<32xf32, #tpu.memory_space<smem>>
    %11 = vector.broadcast %10 : f32 to vector<8x128xf32>
    %12 = arith.mulf %9, %11 : vector<8x128xf32>
    %13 = arith.addf %1, %12 : vector<8x128xf32>
    %c1 = arith.constant 1 : index
    %14 = memref.load %arg2[%c1] : memref<32xf32, #tpu.memory_space<smem>>
    %15 = vector.broadcast %14 : f32 to vector<8x128xf32>
    %16 = arith.mulf %0, %15 : vector<8x128xf32>
    %c1_5 = arith.constant 1 : index
    %17 = memref.load %arg3[%c1_5] : memref<32xf32, #tpu.memory_space<smem>>
    %18 = vector.broadcast %17 : f32 to vector<8x128xf32>
    %19 = arith.addf %16, %18 : vector<8x128xf32>
    %cst_6 = arith.constant 0.000000e+00 : f32
    %20 = vector.broadcast %cst_6 : f32 to vector<8x128xf32>
    %21 = arith.maximumf %19, %20 : vector<8x128xf32>
    %c1_7 = arith.constant 1 : index
    %22 = memref.load %arg4[%c1_7] : memref<32xf32, #tpu.memory_space<smem>>
    %23 = vector.broadcast %22 : f32 to vector<8x128xf32>
    %24 = arith.mulf %21, %23 : vector<8x128xf32>
    %25 = arith.addf %13, %24 : vector<8x128xf32>
    %c2 = arith.constant 2 : index
    %26 = memref.load %arg2[%c2] : memref<32xf32, #tpu.memory_space<smem>>
    %27 = vector.broadcast %26 : f32 to vector<8x128xf32>
    %28 = arith.mulf %0, %27 : vector<8x128xf32>
    %c2_8 = arith.constant 2 : index
    %29 = memref.load %arg3[%c2_8] : memref<32xf32, #tpu.memory_space<smem>>
    %30 = vector.broadcast %29 : f32 to vector<8x128xf32>
    %31 = arith.addf %28, %30 : vector<8x128xf32>
    %cst_9 = arith.constant 0.000000e+00 : f32
    %32 = vector.broadcast %cst_9 : f32 to vector<8x128xf32>
    %33 = arith.maximumf %31, %32 : vector<8x128xf32>
    %c2_10 = arith.constant 2 : index
    %34 = memref.load %arg4[%c2_10] : memref<32xf32, #tpu.memory_space<smem>>
    %35 = vector.broadcast %34 : f32 to vector<8x128xf32>
    %36 = arith.mulf %33, %35 : vector<8x128xf32>
    %37 = arith.addf %25, %36 : vector<8x128xf32>
    %c3 = arith.constant 3 : index
    %38 = memref.load %arg2[%c3] : memref<32xf32, #tpu.memory_space<smem>>
    %39 = vector.broadcast %38 : f32 to vector<8x128xf32>
    %40 = arith.mulf %0, %39 : vector<8x128xf32>
    %c3_11 = arith.constant 3 : index
    %41 = memref.load %arg3[%c3_11] : memref<32xf32, #tpu.memory_space<smem>>
    %42 = vector.broadcast %41 : f32 to vector<8x128xf32>
    %43 = arith.addf %40, %42 : vector<8x128xf32>
    %cst_12 = arith.constant 0.000000e+00 : f32
    %44 = vector.broadcast %cst_12 : f32 to vector<8x128xf32>
    %45 = arith.maximumf %43, %44 : vector<8x128xf32>
    %c3_13 = arith.constant 3 : index
    %46 = memref.load %arg4[%c3_13] : memref<32xf32, #tpu.memory_space<smem>>
    %47 = vector.broadcast %46 : f32 to vector<8x128xf32>
    %48 = arith.mulf %45, %47 : vector<8x128xf32>
    %49 = arith.addf %37, %48 : vector<8x128xf32>
    %c4 = arith.constant 4 : index
    %50 = memref.load %arg2[%c4] : memref<32xf32, #tpu.memory_space<smem>>
    %51 = vector.broadcast %50 : f32 to vector<8x128xf32>
    %52 = arith.mulf %0, %51 : vector<8x128xf32>
    %c4_14 = arith.constant 4 : index
    %53 = memref.load %arg3[%c4_14] : memref<32xf32, #tpu.memory_space<smem>>
    %54 = vector.broadcast %53 : f32 to vector<8x128xf32>
    %55 = arith.addf %52, %54 : vector<8x128xf32>
    %cst_15 = arith.constant 0.000000e+00 : f32
    %56 = vector.broadcast %cst_15 : f32 to vector<8x128xf32>
    %57 = arith.maximumf %55, %56 : vector<8x128xf32>
    %c4_16 = arith.constant 4 : index
    %58 = memref.load %arg4[%c4_16] : memref<32xf32, #tpu.memory_space<smem>>
    %59 = vector.broadcast %58 : f32 to vector<8x128xf32>
    %60 = arith.mulf %57, %59 : vector<8x128xf32>
    %61 = arith.addf %49, %60 : vector<8x128xf32>
    %c5 = arith.constant 5 : index
    %62 = memref.load %arg2[%c5] : memref<32xf32, #tpu.memory_space<smem>>
    %63 = vector.broadcast %62 : f32 to vector<8x128xf32>
    %64 = arith.mulf %0, %63 : vector<8x128xf32>
    %c5_17 = arith.constant 5 : index
    %65 = memref.load %arg3[%c5_17] : memref<32xf32, #tpu.memory_space<smem>>
    %66 = vector.broadcast %65 : f32 to vector<8x128xf32>
    %67 = arith.addf %64, %66 : vector<8x128xf32>
    %cst_18 = arith.constant 0.000000e+00 : f32
    %68 = vector.broadcast %cst_18 : f32 to vector<8x128xf32>
    %69 = arith.maximumf %67, %68 : vector<8x128xf32>
    %c5_19 = arith.constant 5 : index
    %70 = memref.load %arg4[%c5_19] : memref<32xf32, #tpu.memory_space<smem>>
    %71 = vector.broadcast %70 : f32 to vector<8x128xf32>
    %72 = arith.mulf %69, %71 : vector<8x128xf32>
    %73 = arith.addf %61, %72 : vector<8x128xf32>
    %c6 = arith.constant 6 : index
    %74 = memref.load %arg2[%c6] : memref<32xf32, #tpu.memory_space<smem>>
    %75 = vector.broadcast %74 : f32 to vector<8x128xf32>
    %76 = arith.mulf %0, %75 : vector<8x128xf32>
    %c6_20 = arith.constant 6 : index
    %77 = memref.load %arg3[%c6_20] : memref<32xf32, #tpu.memory_space<smem>>
    %78 = vector.broadcast %77 : f32 to vector<8x128xf32>
    %79 = arith.addf %76, %78 : vector<8x128xf32>
    %cst_21 = arith.constant 0.000000e+00 : f32
    %80 = vector.broadcast %cst_21 : f32 to vector<8x128xf32>
    %81 = arith.maximumf %79, %80 : vector<8x128xf32>
    %c6_22 = arith.constant 6 : index
    %82 = memref.load %arg4[%c6_22] : memref<32xf32, #tpu.memory_space<smem>>
    %83 = vector.broadcast %82 : f32 to vector<8x128xf32>
    %84 = arith.mulf %81, %83 : vector<8x128xf32>
    %85 = arith.addf %73, %84 : vector<8x128xf32>
    %c7 = arith.constant 7 : index
    %86 = memref.load %arg2[%c7] : memref<32xf32, #tpu.memory_space<smem>>
    %87 = vector.broadcast %86 : f32 to vector<8x128xf32>
    %88 = arith.mulf %0, %87 : vector<8x128xf32>
    %c7_23 = arith.constant 7 : index
    %89 = memref.load %arg3[%c7_23] : memref<32xf32, #tpu.memory_space<smem>>
    %90 = vector.broadcast %89 : f32 to vector<8x128xf32>
    %91 = arith.addf %88, %90 : vector<8x128xf32>
    %cst_24 = arith.constant 0.000000e+00 : f32
    %92 = vector.broadcast %cst_24 : f32 to vector<8x128xf32>
    %93 = arith.maximumf %91, %92 : vector<8x128xf32>
    %c7_25 = arith.constant 7 : index
    %94 = memref.load %arg4[%c7_25] : memref<32xf32, #tpu.memory_space<smem>>
    %95 = vector.broadcast %94 : f32 to vector<8x128xf32>
    %96 = arith.mulf %93, %95 : vector<8x128xf32>
    %97 = arith.addf %85, %96 : vector<8x128xf32>
    %c8 = arith.constant 8 : index
    %98 = memref.load %arg2[%c8] : memref<32xf32, #tpu.memory_space<smem>>
    %99 = vector.broadcast %98 : f32 to vector<8x128xf32>
    %100 = arith.mulf %0, %99 : vector<8x128xf32>
    %c8_26 = arith.constant 8 : index
    %101 = memref.load %arg3[%c8_26] : memref<32xf32, #tpu.memory_space<smem>>
    %102 = vector.broadcast %101 : f32 to vector<8x128xf32>
    %103 = arith.addf %100, %102 : vector<8x128xf32>
    %cst_27 = arith.constant 0.000000e+00 : f32
    %104 = vector.broadcast %cst_27 : f32 to vector<8x128xf32>
    %105 = arith.maximumf %103, %104 : vector<8x128xf32>
    %c8_28 = arith.constant 8 : index
    %106 = memref.load %arg4[%c8_28] : memref<32xf32, #tpu.memory_space<smem>>
    %107 = vector.broadcast %106 : f32 to vector<8x128xf32>
    %108 = arith.mulf %105, %107 : vector<8x128xf32>
    %109 = arith.addf %97, %108 : vector<8x128xf32>
    %c9 = arith.constant 9 : index
    %110 = memref.load %arg2[%c9] : memref<32xf32, #tpu.memory_space<smem>>
    %111 = vector.broadcast %110 : f32 to vector<8x128xf32>
    %112 = arith.mulf %0, %111 : vector<8x128xf32>
    %c9_29 = arith.constant 9 : index
    %113 = memref.load %arg3[%c9_29] : memref<32xf32, #tpu.memory_space<smem>>
    %114 = vector.broadcast %113 : f32 to vector<8x128xf32>
    %115 = arith.addf %112, %114 : vector<8x128xf32>
    %cst_30 = arith.constant 0.000000e+00 : f32
    %116 = vector.broadcast %cst_30 : f32 to vector<8x128xf32>
    %117 = arith.maximumf %115, %116 : vector<8x128xf32>
    %c9_31 = arith.constant 9 : index
    %118 = memref.load %arg4[%c9_31] : memref<32xf32, #tpu.memory_space<smem>>
    %119 = vector.broadcast %118 : f32 to vector<8x128xf32>
    %120 = arith.mulf %117, %119 : vector<8x128xf32>
    %121 = arith.addf %109, %120 : vector<8x128xf32>
    %c10 = arith.constant 10 : index
    %122 = memref.load %arg2[%c10] : memref<32xf32, #tpu.memory_space<smem>>
    %123 = vector.broadcast %122 : f32 to vector<8x128xf32>
    %124 = arith.mulf %0, %123 : vector<8x128xf32>
    %c10_32 = arith.constant 10 : index
    %125 = memref.load %arg3[%c10_32] : memref<32xf32, #tpu.memory_space<smem>>
    %126 = vector.broadcast %125 : f32 to vector<8x128xf32>
    %127 = arith.addf %124, %126 : vector<8x128xf32>
    %cst_33 = arith.constant 0.000000e+00 : f32
    %128 = vector.broadcast %cst_33 : f32 to vector<8x128xf32>
    %129 = arith.maximumf %127, %128 : vector<8x128xf32>
    %c10_34 = arith.constant 10 : index
    %130 = memref.load %arg4[%c10_34] : memref<32xf32, #tpu.memory_space<smem>>
    %131 = vector.broadcast %130 : f32 to vector<8x128xf32>
    %132 = arith.mulf %129, %131 : vector<8x128xf32>
    %133 = arith.addf %121, %132 : vector<8x128xf32>
    %c11 = arith.constant 11 : index
    %134 = memref.load %arg2[%c11] : memref<32xf32, #tpu.memory_space<smem>>
    %135 = vector.broadcast %134 : f32 to vector<8x128xf32>
    %136 = arith.mulf %0, %135 : vector<8x128xf32>
    %c11_35 = arith.constant 11 : index
    %137 = memref.load %arg3[%c11_35] : memref<32xf32, #tpu.memory_space<smem>>
    %138 = vector.broadcast %137 : f32 to vector<8x128xf32>
    %139 = arith.addf %136, %138 : vector<8x128xf32>
    %cst_36 = arith.constant 0.000000e+00 : f32
    %140 = vector.broadcast %cst_36 : f32 to vector<8x128xf32>
    %141 = arith.maximumf %139, %140 : vector<8x128xf32>
    %c11_37 = arith.constant 11 : index
    %142 = memref.load %arg4[%c11_37] : memref<32xf32, #tpu.memory_space<smem>>
    %143 = vector.broadcast %142 : f32 to vector<8x128xf32>
    %144 = arith.mulf %141, %143 : vector<8x128xf32>
    %145 = arith.addf %133, %144 : vector<8x128xf32>
    %c12 = arith.constant 12 : index
    %146 = memref.load %arg2[%c12] : memref<32xf32, #tpu.memory_space<smem>>
    %147 = vector.broadcast %146 : f32 to vector<8x128xf32>
    %148 = arith.mulf %0, %147 : vector<8x128xf32>
    %c12_38 = arith.constant 12 : index
    %149 = memref.load %arg3[%c12_38] : memref<32xf32, #tpu.memory_space<smem>>
    %150 = vector.broadcast %149 : f32 to vector<8x128xf32>
    %151 = arith.addf %148, %150 : vector<8x128xf32>
    %cst_39 = arith.constant 0.000000e+00 : f32
    %152 = vector.broadcast %cst_39 : f32 to vector<8x128xf32>
    %153 = arith.maximumf %151, %152 : vector<8x128xf32>
    %c12_40 = arith.constant 12 : index
    %154 = memref.load %arg4[%c12_40] : memref<32xf32, #tpu.memory_space<smem>>
    %155 = vector.broadcast %154 : f32 to vector<8x128xf32>
    %156 = arith.mulf %153, %155 : vector<8x128xf32>
    %157 = arith.addf %145, %156 : vector<8x128xf32>
    %c13 = arith.constant 13 : index
    %158 = memref.load %arg2[%c13] : memref<32xf32, #tpu.memory_space<smem>>
    %159 = vector.broadcast %158 : f32 to vector<8x128xf32>
    %160 = arith.mulf %0, %159 : vector<8x128xf32>
    %c13_41 = arith.constant 13 : index
    %161 = memref.load %arg3[%c13_41] : memref<32xf32, #tpu.memory_space<smem>>
    %162 = vector.broadcast %161 : f32 to vector<8x128xf32>
    %163 = arith.addf %160, %162 : vector<8x128xf32>
    %cst_42 = arith.constant 0.000000e+00 : f32
    %164 = vector.broadcast %cst_42 : f32 to vector<8x128xf32>
    %165 = arith.maximumf %163, %164 : vector<8x128xf32>
    %c13_43 = arith.constant 13 : index
    %166 = memref.load %arg4[%c13_43] : memref<32xf32, #tpu.memory_space<smem>>
    %167 = vector.broadcast %166 : f32 to vector<8x128xf32>
    %168 = arith.mulf %165, %167 : vector<8x128xf32>
    %169 = arith.addf %157, %168 : vector<8x128xf32>
    %c14 = arith.constant 14 : index
    %170 = memref.load %arg2[%c14] : memref<32xf32, #tpu.memory_space<smem>>
    %171 = vector.broadcast %170 : f32 to vector<8x128xf32>
    %172 = arith.mulf %0, %171 : vector<8x128xf32>
    %c14_44 = arith.constant 14 : index
    %173 = memref.load %arg3[%c14_44] : memref<32xf32, #tpu.memory_space<smem>>
    %174 = vector.broadcast %173 : f32 to vector<8x128xf32>
    %175 = arith.addf %172, %174 : vector<8x128xf32>
    %cst_45 = arith.constant 0.000000e+00 : f32
    %176 = vector.broadcast %cst_45 : f32 to vector<8x128xf32>
    %177 = arith.maximumf %175, %176 : vector<8x128xf32>
    %c14_46 = arith.constant 14 : index
    %178 = memref.load %arg4[%c14_46] : memref<32xf32, #tpu.memory_space<smem>>
    %179 = vector.broadcast %178 : f32 to vector<8x128xf32>
    %180 = arith.mulf %177, %179 : vector<8x128xf32>
    %181 = arith.addf %169, %180 : vector<8x128xf32>
    %c15 = arith.constant 15 : index
    %182 = memref.load %arg2[%c15] : memref<32xf32, #tpu.memory_space<smem>>
    %183 = vector.broadcast %182 : f32 to vector<8x128xf32>
    %184 = arith.mulf %0, %183 : vector<8x128xf32>
    %c15_47 = arith.constant 15 : index
    %185 = memref.load %arg3[%c15_47] : memref<32xf32, #tpu.memory_space<smem>>
    %186 = vector.broadcast %185 : f32 to vector<8x128xf32>
    %187 = arith.addf %184, %186 : vector<8x128xf32>
    %cst_48 = arith.constant 0.000000e+00 : f32
    %188 = vector.broadcast %cst_48 : f32 to vector<8x128xf32>
    %189 = arith.maximumf %187, %188 : vector<8x128xf32>
    %c15_49 = arith.constant 15 : index
    %190 = memref.load %arg4[%c15_49] : memref<32xf32, #tpu.memory_space<smem>>
    %191 = vector.broadcast %190 : f32 to vector<8x128xf32>
    %192 = arith.mulf %189, %191 : vector<8x128xf32>
    %193 = arith.addf %181, %192 : vector<8x128xf32>
    %c16 = arith.constant 16 : index
    %194 = memref.load %arg2[%c16] : memref<32xf32, #tpu.memory_space<smem>>
    %195 = vector.broadcast %194 : f32 to vector<8x128xf32>
    %196 = arith.mulf %0, %195 : vector<8x128xf32>
    %c16_50 = arith.constant 16 : index
    %197 = memref.load %arg3[%c16_50] : memref<32xf32, #tpu.memory_space<smem>>
    %198 = vector.broadcast %197 : f32 to vector<8x128xf32>
    %199 = arith.addf %196, %198 : vector<8x128xf32>
    %cst_51 = arith.constant 0.000000e+00 : f32
    %200 = vector.broadcast %cst_51 : f32 to vector<8x128xf32>
    %201 = arith.maximumf %199, %200 : vector<8x128xf32>
    %c16_52 = arith.constant 16 : index
    %202 = memref.load %arg4[%c16_52] : memref<32xf32, #tpu.memory_space<smem>>
    %203 = vector.broadcast %202 : f32 to vector<8x128xf32>
    %204 = arith.mulf %201, %203 : vector<8x128xf32>
    %205 = arith.addf %193, %204 : vector<8x128xf32>
    %c17 = arith.constant 17 : index
    %206 = memref.load %arg2[%c17] : memref<32xf32, #tpu.memory_space<smem>>
    %207 = vector.broadcast %206 : f32 to vector<8x128xf32>
    %208 = arith.mulf %0, %207 : vector<8x128xf32>
    %c17_53 = arith.constant 17 : index
    %209 = memref.load %arg3[%c17_53] : memref<32xf32, #tpu.memory_space<smem>>
    %210 = vector.broadcast %209 : f32 to vector<8x128xf32>
    %211 = arith.addf %208, %210 : vector<8x128xf32>
    %cst_54 = arith.constant 0.000000e+00 : f32
    %212 = vector.broadcast %cst_54 : f32 to vector<8x128xf32>
    %213 = arith.maximumf %211, %212 : vector<8x128xf32>
    %c17_55 = arith.constant 17 : index
    %214 = memref.load %arg4[%c17_55] : memref<32xf32, #tpu.memory_space<smem>>
    %215 = vector.broadcast %214 : f32 to vector<8x128xf32>
    %216 = arith.mulf %213, %215 : vector<8x128xf32>
    %217 = arith.addf %205, %216 : vector<8x128xf32>
    %c18 = arith.constant 18 : index
    %218 = memref.load %arg2[%c18] : memref<32xf32, #tpu.memory_space<smem>>
    %219 = vector.broadcast %218 : f32 to vector<8x128xf32>
    %220 = arith.mulf %0, %219 : vector<8x128xf32>
    %c18_56 = arith.constant 18 : index
    %221 = memref.load %arg3[%c18_56] : memref<32xf32, #tpu.memory_space<smem>>
    %222 = vector.broadcast %221 : f32 to vector<8x128xf32>
    %223 = arith.addf %220, %222 : vector<8x128xf32>
    %cst_57 = arith.constant 0.000000e+00 : f32
    %224 = vector.broadcast %cst_57 : f32 to vector<8x128xf32>
    %225 = arith.maximumf %223, %224 : vector<8x128xf32>
    %c18_58 = arith.constant 18 : index
    %226 = memref.load %arg4[%c18_58] : memref<32xf32, #tpu.memory_space<smem>>
    %227 = vector.broadcast %226 : f32 to vector<8x128xf32>
    %228 = arith.mulf %225, %227 : vector<8x128xf32>
    %229 = arith.addf %217, %228 : vector<8x128xf32>
    %c19 = arith.constant 19 : index
    %230 = memref.load %arg2[%c19] : memref<32xf32, #tpu.memory_space<smem>>
    %231 = vector.broadcast %230 : f32 to vector<8x128xf32>
    %232 = arith.mulf %0, %231 : vector<8x128xf32>
    %c19_59 = arith.constant 19 : index
    %233 = memref.load %arg3[%c19_59] : memref<32xf32, #tpu.memory_space<smem>>
    %234 = vector.broadcast %233 : f32 to vector<8x128xf32>
    %235 = arith.addf %232, %234 : vector<8x128xf32>
    %cst_60 = arith.constant 0.000000e+00 : f32
    %236 = vector.broadcast %cst_60 : f32 to vector<8x128xf32>
    %237 = arith.maximumf %235, %236 : vector<8x128xf32>
    %c19_61 = arith.constant 19 : index
    %238 = memref.load %arg4[%c19_61] : memref<32xf32, #tpu.memory_space<smem>>
    %239 = vector.broadcast %238 : f32 to vector<8x128xf32>
    %240 = arith.mulf %237, %239 : vector<8x128xf32>
    %241 = arith.addf %229, %240 : vector<8x128xf32>
    %c20 = arith.constant 20 : index
    %242 = memref.load %arg2[%c20] : memref<32xf32, #tpu.memory_space<smem>>
    %243 = vector.broadcast %242 : f32 to vector<8x128xf32>
    %244 = arith.mulf %0, %243 : vector<8x128xf32>
    %c20_62 = arith.constant 20 : index
    %245 = memref.load %arg3[%c20_62] : memref<32xf32, #tpu.memory_space<smem>>
    %246 = vector.broadcast %245 : f32 to vector<8x128xf32>
    %247 = arith.addf %244, %246 : vector<8x128xf32>
    %cst_63 = arith.constant 0.000000e+00 : f32
    %248 = vector.broadcast %cst_63 : f32 to vector<8x128xf32>
    %249 = arith.maximumf %247, %248 : vector<8x128xf32>
    %c20_64 = arith.constant 20 : index
    %250 = memref.load %arg4[%c20_64] : memref<32xf32, #tpu.memory_space<smem>>
    %251 = vector.broadcast %250 : f32 to vector<8x128xf32>
    %252 = arith.mulf %249, %251 : vector<8x128xf32>
    %253 = arith.addf %241, %252 : vector<8x128xf32>
    %c21 = arith.constant 21 : index
    %254 = memref.load %arg2[%c21] : memref<32xf32, #tpu.memory_space<smem>>
    %255 = vector.broadcast %254 : f32 to vector<8x128xf32>
    %256 = arith.mulf %0, %255 : vector<8x128xf32>
    %c21_65 = arith.constant 21 : index
    %257 = memref.load %arg3[%c21_65] : memref<32xf32, #tpu.memory_space<smem>>
    %258 = vector.broadcast %257 : f32 to vector<8x128xf32>
    %259 = arith.addf %256, %258 : vector<8x128xf32>
    %cst_66 = arith.constant 0.000000e+00 : f32
    %260 = vector.broadcast %cst_66 : f32 to vector<8x128xf32>
    %261 = arith.maximumf %259, %260 : vector<8x128xf32>
    %c21_67 = arith.constant 21 : index
    %262 = memref.load %arg4[%c21_67] : memref<32xf32, #tpu.memory_space<smem>>
    %263 = vector.broadcast %262 : f32 to vector<8x128xf32>
    %264 = arith.mulf %261, %263 : vector<8x128xf32>
    %265 = arith.addf %253, %264 : vector<8x128xf32>
    %c22 = arith.constant 22 : index
    %266 = memref.load %arg2[%c22] : memref<32xf32, #tpu.memory_space<smem>>
    %267 = vector.broadcast %266 : f32 to vector<8x128xf32>
    %268 = arith.mulf %0, %267 : vector<8x128xf32>
    %c22_68 = arith.constant 22 : index
    %269 = memref.load %arg3[%c22_68] : memref<32xf32, #tpu.memory_space<smem>>
    %270 = vector.broadcast %269 : f32 to vector<8x128xf32>
    %271 = arith.addf %268, %270 : vector<8x128xf32>
    %cst_69 = arith.constant 0.000000e+00 : f32
    %272 = vector.broadcast %cst_69 : f32 to vector<8x128xf32>
    %273 = arith.maximumf %271, %272 : vector<8x128xf32>
    %c22_70 = arith.constant 22 : index
    %274 = memref.load %arg4[%c22_70] : memref<32xf32, #tpu.memory_space<smem>>
    %275 = vector.broadcast %274 : f32 to vector<8x128xf32>
    %276 = arith.mulf %273, %275 : vector<8x128xf32>
    %277 = arith.addf %265, %276 : vector<8x128xf32>
    %c23 = arith.constant 23 : index
    %278 = memref.load %arg2[%c23] : memref<32xf32, #tpu.memory_space<smem>>
    %279 = vector.broadcast %278 : f32 to vector<8x128xf32>
    %280 = arith.mulf %0, %279 : vector<8x128xf32>
    %c23_71 = arith.constant 23 : index
    %281 = memref.load %arg3[%c23_71] : memref<32xf32, #tpu.memory_space<smem>>
    %282 = vector.broadcast %281 : f32 to vector<8x128xf32>
    %283 = arith.addf %280, %282 : vector<8x128xf32>
    %cst_72 = arith.constant 0.000000e+00 : f32
    %284 = vector.broadcast %cst_72 : f32 to vector<8x128xf32>
    %285 = arith.maximumf %283, %284 : vector<8x128xf32>
    %c23_73 = arith.constant 23 : index
    %286 = memref.load %arg4[%c23_73] : memref<32xf32, #tpu.memory_space<smem>>
    %287 = vector.broadcast %286 : f32 to vector<8x128xf32>
    %288 = arith.mulf %285, %287 : vector<8x128xf32>
    %289 = arith.addf %277, %288 : vector<8x128xf32>
    %c24 = arith.constant 24 : index
    %290 = memref.load %arg2[%c24] : memref<32xf32, #tpu.memory_space<smem>>
    %291 = vector.broadcast %290 : f32 to vector<8x128xf32>
    %292 = arith.mulf %0, %291 : vector<8x128xf32>
    %c24_74 = arith.constant 24 : index
    %293 = memref.load %arg3[%c24_74] : memref<32xf32, #tpu.memory_space<smem>>
    %294 = vector.broadcast %293 : f32 to vector<8x128xf32>
    %295 = arith.addf %292, %294 : vector<8x128xf32>
    %cst_75 = arith.constant 0.000000e+00 : f32
    %296 = vector.broadcast %cst_75 : f32 to vector<8x128xf32>
    %297 = arith.maximumf %295, %296 : vector<8x128xf32>
    %c24_76 = arith.constant 24 : index
    %298 = memref.load %arg4[%c24_76] : memref<32xf32, #tpu.memory_space<smem>>
    %299 = vector.broadcast %298 : f32 to vector<8x128xf32>
    %300 = arith.mulf %297, %299 : vector<8x128xf32>
    %301 = arith.addf %289, %300 : vector<8x128xf32>
    %c25 = arith.constant 25 : index
    %302 = memref.load %arg2[%c25] : memref<32xf32, #tpu.memory_space<smem>>
    %303 = vector.broadcast %302 : f32 to vector<8x128xf32>
    %304 = arith.mulf %0, %303 : vector<8x128xf32>
    %c25_77 = arith.constant 25 : index
    %305 = memref.load %arg3[%c25_77] : memref<32xf32, #tpu.memory_space<smem>>
    %306 = vector.broadcast %305 : f32 to vector<8x128xf32>
    %307 = arith.addf %304, %306 : vector<8x128xf32>
    %cst_78 = arith.constant 0.000000e+00 : f32
    %308 = vector.broadcast %cst_78 : f32 to vector<8x128xf32>
    %309 = arith.maximumf %307, %308 : vector<8x128xf32>
    %c25_79 = arith.constant 25 : index
    %310 = memref.load %arg4[%c25_79] : memref<32xf32, #tpu.memory_space<smem>>
    %311 = vector.broadcast %310 : f32 to vector<8x128xf32>
    %312 = arith.mulf %309, %311 : vector<8x128xf32>
    %313 = arith.addf %301, %312 : vector<8x128xf32>
    %c26 = arith.constant 26 : index
    %314 = memref.load %arg2[%c26] : memref<32xf32, #tpu.memory_space<smem>>
    %315 = vector.broadcast %314 : f32 to vector<8x128xf32>
    %316 = arith.mulf %0, %315 : vector<8x128xf32>
    %c26_80 = arith.constant 26 : index
    %317 = memref.load %arg3[%c26_80] : memref<32xf32, #tpu.memory_space<smem>>
    %318 = vector.broadcast %317 : f32 to vector<8x128xf32>
    %319 = arith.addf %316, %318 : vector<8x128xf32>
    %cst_81 = arith.constant 0.000000e+00 : f32
    %320 = vector.broadcast %cst_81 : f32 to vector<8x128xf32>
    %321 = arith.maximumf %319, %320 : vector<8x128xf32>
    %c26_82 = arith.constant 26 : index
    %322 = memref.load %arg4[%c26_82] : memref<32xf32, #tpu.memory_space<smem>>
    %323 = vector.broadcast %322 : f32 to vector<8x128xf32>
    %324 = arith.mulf %321, %323 : vector<8x128xf32>
    %325 = arith.addf %313, %324 : vector<8x128xf32>
    %c27 = arith.constant 27 : index
    %326 = memref.load %arg2[%c27] : memref<32xf32, #tpu.memory_space<smem>>
    %327 = vector.broadcast %326 : f32 to vector<8x128xf32>
    %328 = arith.mulf %0, %327 : vector<8x128xf32>
    %c27_83 = arith.constant 27 : index
    %329 = memref.load %arg3[%c27_83] : memref<32xf32, #tpu.memory_space<smem>>
    %330 = vector.broadcast %329 : f32 to vector<8x128xf32>
    %331 = arith.addf %328, %330 : vector<8x128xf32>
    %cst_84 = arith.constant 0.000000e+00 : f32
    %332 = vector.broadcast %cst_84 : f32 to vector<8x128xf32>
    %333 = arith.maximumf %331, %332 : vector<8x128xf32>
    %c27_85 = arith.constant 27 : index
    %334 = memref.load %arg4[%c27_85] : memref<32xf32, #tpu.memory_space<smem>>
    %335 = vector.broadcast %334 : f32 to vector<8x128xf32>
    %336 = arith.mulf %333, %335 : vector<8x128xf32>
    %337 = arith.addf %325, %336 : vector<8x128xf32>
    %c28 = arith.constant 28 : index
    %338 = memref.load %arg2[%c28] : memref<32xf32, #tpu.memory_space<smem>>
    %339 = vector.broadcast %338 : f32 to vector<8x128xf32>
    %340 = arith.mulf %0, %339 : vector<8x128xf32>
    %c28_86 = arith.constant 28 : index
    %341 = memref.load %arg3[%c28_86] : memref<32xf32, #tpu.memory_space<smem>>
    %342 = vector.broadcast %341 : f32 to vector<8x128xf32>
    %343 = arith.addf %340, %342 : vector<8x128xf32>
    %cst_87 = arith.constant 0.000000e+00 : f32
    %344 = vector.broadcast %cst_87 : f32 to vector<8x128xf32>
    %345 = arith.maximumf %343, %344 : vector<8x128xf32>
    %c28_88 = arith.constant 28 : index
    %346 = memref.load %arg4[%c28_88] : memref<32xf32, #tpu.memory_space<smem>>
    %347 = vector.broadcast %346 : f32 to vector<8x128xf32>
    %348 = arith.mulf %345, %347 : vector<8x128xf32>
    %349 = arith.addf %337, %348 : vector<8x128xf32>
    %c29 = arith.constant 29 : index
    %350 = memref.load %arg2[%c29] : memref<32xf32, #tpu.memory_space<smem>>
    %351 = vector.broadcast %350 : f32 to vector<8x128xf32>
    %352 = arith.mulf %0, %351 : vector<8x128xf32>
    %c29_89 = arith.constant 29 : index
    %353 = memref.load %arg3[%c29_89] : memref<32xf32, #tpu.memory_space<smem>>
    %354 = vector.broadcast %353 : f32 to vector<8x128xf32>
    %355 = arith.addf %352, %354 : vector<8x128xf32>
    %cst_90 = arith.constant 0.000000e+00 : f32
    %356 = vector.broadcast %cst_90 : f32 to vector<8x128xf32>
    %357 = arith.maximumf %355, %356 : vector<8x128xf32>
    %c29_91 = arith.constant 29 : index
    %358 = memref.load %arg4[%c29_91] : memref<32xf32, #tpu.memory_space<smem>>
    %359 = vector.broadcast %358 : f32 to vector<8x128xf32>
    %360 = arith.mulf %357, %359 : vector<8x128xf32>
    %361 = arith.addf %349, %360 : vector<8x128xf32>
    %c30 = arith.constant 30 : index
    %362 = memref.load %arg2[%c30] : memref<32xf32, #tpu.memory_space<smem>>
    %363 = vector.broadcast %362 : f32 to vector<8x128xf32>
    %364 = arith.mulf %0, %363 : vector<8x128xf32>
    %c30_92 = arith.constant 30 : index
    %365 = memref.load %arg3[%c30_92] : memref<32xf32, #tpu.memory_space<smem>>
    %366 = vector.broadcast %365 : f32 to vector<8x128xf32>
    %367 = arith.addf %364, %366 : vector<8x128xf32>
    %cst_93 = arith.constant 0.000000e+00 : f32
    %368 = vector.broadcast %cst_93 : f32 to vector<8x128xf32>
    %369 = arith.maximumf %367, %368 : vector<8x128xf32>
    %c30_94 = arith.constant 30 : index
    %370 = memref.load %arg4[%c30_94] : memref<32xf32, #tpu.memory_space<smem>>
    %371 = vector.broadcast %370 : f32 to vector<8x128xf32>
    %372 = arith.mulf %369, %371 : vector<8x128xf32>
    %373 = arith.addf %361, %372 : vector<8x128xf32>
    %c31 = arith.constant 31 : index
    %374 = memref.load %arg2[%c31] : memref<32xf32, #tpu.memory_space<smem>>
    %375 = vector.broadcast %374 : f32 to vector<8x128xf32>
    %376 = arith.mulf %0, %375 : vector<8x128xf32>
    %c31_95 = arith.constant 31 : index
    %377 = memref.load %arg3[%c31_95] : memref<32xf32, #tpu.memory_space<smem>>
    %378 = vector.broadcast %377 : f32 to vector<8x128xf32>
    %379 = arith.addf %376, %378 : vector<8x128xf32>
    %cst_96 = arith.constant 0.000000e+00 : f32
    %380 = vector.broadcast %cst_96 : f32 to vector<8x128xf32>
    %381 = arith.maximumf %379, %380 : vector<8x128xf32>
    %c31_97 = arith.constant 31 : index
    %382 = memref.load %arg4[%c31_97] : memref<32xf32, #tpu.memory_space<smem>>
    %383 = vector.broadcast %382 : f32 to vector<8x128xf32>
    %384 = arith.mulf %381, %383 : vector<8x128xf32>
    %385 = arith.addf %373, %384 : vector<8x128xf32>
    %c0_98 = arith.constant 0 : index
    %386 = memref.load %arg5[%c0_98] : memref<1xf32, #tpu.memory_space<smem>>
    %387 = vector.broadcast %386 : f32 to vector<8x128xf32>
    %388 = arith.addf %385, %387 : vector<8x128xf32>
    %c0_99 = arith.constant 0 : index
    %c0_100 = arith.constant 0 : index
    %389 = vector.load %arg6[%c0_99, %c0_100] : memref<8x128xf32, #tpu.memory_space<vmem>>, vector<8x128xf32>
    tpu.vector_store %arg6[%c0_99, %c0_100], %388 {strides = array<i32>} : memref<8x128xf32, #tpu.memory_space<vmem>>, vector<8x128xf32>,
    return
  }
  func.func @transform_0(%arg0: i32) -> (i32, i32) {
    %c0_i32 = arith.constant 0 : i32
    %c0_i32_0 = arith.constant 0 : i32
    return %arg0, %c0_i32 : i32, i32
  }
  func.func @transform_1(%arg0: i32) -> i32 {
    %c0_i32 = arith.constant 0 : i32
    %c0_i32_0 = arith.constant 0 : i32
    return %c0_i32 : i32
  }
  func.func @transform_2(%arg0: i32) -> i32 {
    %c0_i32 = arith.constant 0 : i32
    %c0_i32_0 = arith.constant 0 : i32
    return %c0_i32 : i32
  }
  func.func @transform_3(%arg0: i32) -> i32 {
    %c0_i32 = arith.constant 0 : i32
    %c0_i32_0 = arith.constant 0 : i32
    return %c0_i32 : i32
  }
  func.func @transform_4(%arg0: i32) -> i32 {
    %c0_i32 = arith.constant 0 : i32
    %c0_i32_0 = arith.constant 0 : i32
    return %c0_i32 : i32
  }
  func.func @transform_5(%arg0: i32) -> (i32, i32) {
    %c0_i32 = arith.constant 0 : i32
    %c0_i32_0 = arith.constant 0 : i32
    return %arg0, %c0_i32 : i32, i32
  }
}

</mosaic_0001>

<llo_original>
// kernel: tpu_custom_call.1
$region0: #{tpu_custom_call.1}
  #allocation0 [shape = 'u32[]', space=smem, size = 0x4, offset = 0x4, fixed_abs, tag = 'smem constant byte address 0x4 - core index']
  #allocation1 [shape = 'u32[72,128]{1,0:T(1,128)}', space=vmem, size = 0x9000, scoped, tag = 'internal scratch']
  #allocation2 [shape = 'f32[1]{0:T(128)S(6)}', space=smem, size = 0x200, scoped, tag = 'scoped memory for tpu_custom_call.1']
  %s0 = inlined_call_operand.hbm [shape: f32[16,128], index: 0, kind: input, shape index: {}]
  %s1 = inlined_call_operand.vmem [shape: f32[32], index: 1, kind: input, shape index: {}]
  %s2 = inlined_call_operand.vmem [shape: f32[32], index: 2, kind: input, shape index: {}]
  %s3 = inlined_call_operand.vmem [shape: f32[32], index: 3, kind: input, shape index: {}]
  %s4 = inlined_call_operand.<no memory space> [shape: f32[1], index: 4, kind: input, shape index: {}]
  %s5 = inlined_call_operand.hbm [shape: f32[16,128], index: 5, kind: output, shape index: {}]
  %s6 = sld [smem:[#allocation0]]
  $region69: #{tpu_custom_call.1} parent=0
    _
  %s8 = ssub.s32 1, %s6
  %s9 = scalar_select 0, %s8, %s6
  %10 = sst [smem:[#allocation2]] %s4
  $region1: #{tpu_custom_call.1} parent=0
    #allocation3 [shape = 'u8[8192]{0}', space=vmem, size = 0x2000, scoped, tag = 'input window, operand 0']
    #allocation4 [shape = 's32[2]{0}', space=sflag, size = 0x8, scoped, tag = 'scoped memory for tpu_custom_call.1']
    #allocation5 [shape = 's32[2]{0}', space=sflag, size = 0x8, scoped, tag = 'scoped memory for tpu_custom_call.1']
    #allocation6 [shape = 's32[2]{0}', space=sflag, size = 0x8, scoped, tag = 'scoped memory for tpu_custom_call.1']
    #allocation7 [shape = 'u8[512]{0}', space=smem, size = 0x200, scoped, tag = 'input window, operand 1, single buffered']
    #allocation8 [shape = 'u8[512]{0}', space=smem, size = 0x200, scoped, tag = 'input window, operand 2, single buffered']
    #allocation9 [shape = 's32[1]{0}', space=sflag, size = 0x4, scoped, tag = 'scoped memory for tpu_custom_call.1']
    #allocation10 [shape = 'u8[512]{0}', space=smem, size = 0x200, scoped, tag = 'input window, operand 3, single buffered']
    #allocation11 [shape = 'u8[8192]{0}', space=vmem, size = 0x2000, scoped, tag = 'output window, operand 0']
    %11 = vsyncpa [#allocation4], 0
    %s12 = scalar_lea.sflag [#allocation4], 1
    %13 = vsyncpa %s12, 0
    %14 = vsyncpa [#allocation6], 0
    %15 = vsyncpa [#allocation9], 0
    %16 = vsyncpa [#allocation5], 0
    %s17 = scalar_lea.sflag [#allocation5], 1
    %18 = vsyncpa %s17, 0
    loop: start=0, step=1, limit=4
    $region2: #{tpu_custom_call.1} parent=1 // loop_pre_header
      _
    $region3: #{tpu_custom_call.1} parent=1 // loop_header
      %s20 = sphi 0, %s24
      %p21 = scmp.ge.s32.totalorder %s20, 4
      %s30 = sphi 0, %s32
      %s33 = sphi 0, %s30
      %s34 = sphi 0, %s33
      %s50 = sphi 0, %s34
      %s54 = sphi 0, %s54
      %s56 = sphi 0, %s54
      %s57 = sphi 0, %s56
      %s71 = sphi 0, %s57
      %s75 = sphi 0, %s75
      %s77 = sphi 0, %s75
      %s78 = sphi 0, %s77
      %s92 = sphi 0, %s78
      %s96 = sphi 0, %s96
      %s98 = sphi 0, %s96
      %s99 = sphi 0, %s98
      %s113 = sphi 0, %s99
      %s117 = sphi 0, %s117
      %s119 = sphi 0, %s117
      %s120 = sphi 0, %s119
      %s134 = sphi 0, %s120
      %s140 = sphi 0, %s142
      %s143 = sphi 0, %s140
      %s144 = sphi 0, %s143
      %s160 = sphi 0, %s144
    $region4: #{tpu_custom_call.1} parent=1 // loop_header_branch
      %23 = sbr.rel (%p21) target = $region8
    $region5: #{tpu_custom_call.1} parent=1 // loop_body
      %s25 = ssub.s32 %s20, 1
      %s26 = ssub.s32 %s20, 2
      %s27 = sadd.s32 %s20, 1
      %s28 = ssub.s32 %s20, %s27
      %p29 = scmp.eq.s32.totalorder %s28, 0
      %s31 = sadd.s32 %s30, 1
      %s32 = scalar_select %p29, %s30, %s31
      %p35 = pneg %p29
      %p36 = scmp.eq.s32.totalorder %s20, 1
      %p37 = por %p35, %p36
      %p38 = scmp.ne.s32.totalorder %s30, %s33
      %p39 = scmp.eq.s32.totalorder %s20, 0
      %p40 = por %p38, %p39
      %p41 = scmp.ne.s32.totalorder %s30, %s33
      %p42 = scmp.eq.s32.totalorder %s25, 1
      %p43 = por %p41, %p42
      %p44 = scmp.ne.s32.totalorder %s33, %s34
      %p45 = scmp.eq.s32.totalorder %s25, 0
      %p46 = por %p44, %p45
      %p47 = scmp.ne.s32.totalorder %s33, %s34
      %p48 = scmp.eq.s32.totalorder %s26, 1
      %p49 = por %p47, %p48
      %p51 = scmp.ne.s32.totalorder %s34, %s50
      %p52 = scmp.eq.s32.totalorder %s26, 0
      %p53 = por %p51, %p52
      %s55 = sadd.s32 %s54, 1
      %p58 = scmp.eq.s32.totalorder %s20, 1
      %p59 = scmp.ne.s32.totalorder %s54, %s56
      %p60 = scmp.eq.s32.totalorder %s20, 0
      %p61 = por %p59, %p60
      %p62 = scmp.ne.s32.totalorder %s54, %s56
      %p63 = scmp.eq.s32.totalorder %s25, 1
      %p64 = por %p62, %p63
      %p65 = scmp.ne.s32.totalorder %s56, %s57
      %p66 = scmp.eq.s32.totalorder %s25, 0
      %p67 = por %p65, %p66
      %p68 = scmp.ne.s32.totalorder %s56, %s57
      %p69 = scmp.eq.s32.totalorder %s26, 1
      %p70 = por %p68, %p69
      %p72 = scmp.ne.s32.totalorder %s57, %s71
      %p73 = scmp.eq.s32.totalorder %s26, 0
      %p74 = por %p72, %p73
      %s76 = sadd.s32 %s75, 1
      %p79 = scmp.eq.s32.totalorder %s20, 1
      %p80 = scmp.ne.s32.totalorder %s75, %s77
      %p81 = scmp.eq.s32.totalorder %s20, 0
      %p82 = por %p80, %p81
      %p83 = scmp.ne.s32.totalorder %s75, %s77
      %p84 = scmp.eq.s32.totalorder %s25, 1
      %p85 = por %p83, %p84
      %p86 = scmp.ne.s32.totalorder %s77, %s78
      %p87 = scmp.eq.s32.totalorder %s25, 0
      %p88 = por %p86, %p87
      %p89 = scmp.ne.s32.totalorder %s77, %s78
      %p90 = scmp.eq.s32.totalorder %s26, 1
      %p91 = por %p89, %p90
      %p93 = scmp.ne.s32.totalorder %s78, %s92
      %p94 = scmp.eq.s32.totalorder %s26, 0
      %p95 = por %p93, %p94
      %s97 = sadd.s32 %s96, 1
      %p100 = scmp.eq.s32.totalorder %s20, 1
      %p101 = scmp.ne.s32.totalorder %s96, %s98
      %p102 = scmp.eq.s32.totalorder %s20, 0
      %p103 = por %p101, %p102
      %p104 = scmp.ne.s32.totalorder %s96, %s98
      %p105 = scmp.eq.s32.totalorder %s25, 1
      %p106 = por %p104, %p105
      %p107 = scmp.ne.s32.totalorder %s98, %s99
      %p108 = scmp.eq.s32.totalorder %s25, 0
      %p109 = por %p107, %p108
      %p110 = scmp.ne.s32.totalorder %s98, %s99
      %p111 = scmp.eq.s32.totalorder %s26, 1
      %p112 = por %p110, %p111
      %p114 = scmp.ne.s32.totalorder %s99, %s113
      %p115 = scmp.eq.s32.totalorder %s26, 0
      %p116 = por %p114, %p115
      %s118 = sadd.s32 %s117, 1
      %p121 = scmp.eq.s32.totalorder %s20, 1
      %p122 = scmp.ne.s32.totalorder %s117, %s119
      %p123 = scmp.eq.s32.totalorder %s20, 0
      %p124 = por %p122, %p123
      %p125 = scmp.ne.s32.totalorder %s117, %s119
      %p126 = scmp.eq.s32.totalorder %s25, 1
      %p127 = por %p125, %p126
      %p128 = scmp.ne.s32.totalorder %s119, %s120
      %p129 = scmp.eq.s32.totalorder %s25, 0
      %p130 = por %p128, %p129
      %p131 = scmp.ne.s32.totalorder %s119, %s120
      %p132 = scmp.eq.s32.totalorder %s26, 1
      %p133 = por %p131, %p132
      %p135 = scmp.ne.s32.totalorder %s120, %s134
      %p136 = scmp.eq.s32.totalorder %s26, 0
      %p137 = por %p135, %p136
      %s138 = ssub.s32 %s20, %s27
      %p139 = scmp.eq.s32.totalorder %s138, 0
      %s141 = sadd.s32 %s140, 1
      %s142 = scalar_select %p139, %s140, %s141
      %p145 = pneg %p139
      %p146 = scmp.eq.s32.totalorder %s20, 1
      %p147 = por %p145, %p146
      %p148 = scmp.ne.s32.totalorder %s140, %s143
      %p149 = scmp.eq.s32.totalorder %s20, 0
      %p150 = por %p148, %p149
      %p151 = scmp.ne.s32.totalorder %s140, %s143
      %p152 = scmp.eq.s32.totalorder %s25, 1
      %p153 = por %p151, %p152
      %p154 = scmp.ne.s32.totalorder %s143, %s144
      %p155 = scmp.eq.s32.totalorder %s25, 0
      %p156 = por %p154, %p155
      %p157 = scmp.ne.s32.totalorder %s143, %s144
      %p158 = scmp.eq.s32.totalorder %s26, 1
      %p159 = por %p157, %p158
      %p161 = scmp.ne.s32.totalorder %s144, %s160
      %p162 = scmp.eq.s32.totalorder %s26, 0
      %p163 = por %p161, %p162
      %p164 = scmp.le.s32.totalorder 1, %s20
      %p165 = scmp.lt.s32.totalorder %s20, 3
      %p166 = pnand %p164, %p165
      %p167 = pneg %p166
      // Predicated region
      $region9: #{tpu_custom_call.1} parent=5 // pred_check
        _
      $region10: #{tpu_custom_call.1} parent=5 // pred_check_branch
        %169 = sbr.rel (%p166) target = $region12
      $region11: #{tpu_custom_call.1} parent=5 // pred_region
        %s170 = ssub.s32 %s20, 1
        // Predicated region
        $region13: #{tpu_custom_call.1} parent=11 // pred_check
          %p171 = pneg %p67
        $region14: #{tpu_custom_call.1} parent=11 // pred_check_branch
          %173 = sbr.rel (%p171) target = $region16
        $region15: #{tpu_custom_call.1} parent=11 // pred_region
          %175 = vsyncadd [#allocation6], 0
          %s177 = sshll.u32 %s1, 4
          %s178 = int_to_ptr.vmem [resolvable:$true] %s177
          %180 = dma.vmem_to_smem %s178, 16, [#allocation7], [#allocation6]
        $region16: #{tpu_custom_call.1} parent=11 // pred_fallthru
          _
        // Predicated region
        $region17: #{tpu_custom_call.1} parent=11 // pred_check
          %p181 = pneg %p88
        $region18: #{tpu_custom_call.1} parent=11 // pred_check_branch
          %183 = sbr.rel (%p181) target = $region20
        $region19: #{tpu_custom_call.1} parent=11 // pred_region
          %185 = vsyncadd [#allocation9], 0
          %s187 = sshll.u32 %s2, 4
          %s188 = int_to_ptr.vmem [resolvable:$true] %s187
          %190 = dma.vmem_to_smem %s188, 16, [#allocation8], [#allocation9]
        $region20: #{tpu_custom_call.1} parent=11 // pred_fallthru
          _
        // Predicated region
        $region21: #{tpu_custom_call.1} parent=11 // pred_check
          %p191 = pneg %p109
        $region22: #{tpu_custom_call.1} parent=11 // pred_check_branch
          %193 = sbr.rel (%p191) target = $region24
        $region23: #{tpu_custom_call.1} parent=11 // pred_region
          %195 = vsyncadd [#allocation9], 0
          %s197 = sshll.u32 %s3, 4
          %s198 = int_to_ptr.vmem [resolvable:$true] %s197
          %200 = dma.vmem_to_smem %s198, 16, [#allocation10], [#allocation9]
        $region24: #{tpu_custom_call.1} parent=11 // pred_fallthru
          _
        // Predicated region
        $region25: #{tpu_custom_call.1} parent=11 // pred_check
          %p201 = pneg %p130
        $region26: #{tpu_custom_call.1} parent=11 // pred_check_branch
          %203 = sbr.rel (%p201) target = $region28
        $region27: #{tpu_custom_call.1} parent=11 // pred_region
          _
        $region28: #{tpu_custom_call.1} parent=11 // pred_fallthru
          _
      $region12: #{tpu_custom_call.1} parent=5 // pred_fallthru
        _
      %p204 = scmp.lt.s32.totalorder %s20, 2
      // Predicated region
      $region29: #{tpu_custom_call.1} parent=5 // pred_check
        %p205 = pneg %p204
      $region30: #{tpu_custom_call.1} parent=5 // pred_check_branch
        %207 = sbr.rel (%p205) target = $region32
      $region31: #{tpu_custom_call.1} parent=5 // pred_region
        // Predicated region
        $region33: #{tpu_custom_call.1} parent=31 // pred_check
          %p208 = pneg %p40
        $region34: #{tpu_custom_call.1} parent=31 // pred_check_branch
          %210 = sbr.rel (%p208) target = $region36
        $region35: #{tpu_custom_call.1} parent=31 // pred_region
          %s211 = sand.u32 %s30, 1
          %s212 = scalar_lea.sflag [#allocation4], %s211
          %s213 = sand.u32 %s30, 1
          %s214 = smul.addr %s213, 8
          %s215 = scalar_lea.vmem [#allocation3], %s214
          %217 = vsyncadd %s212, 0
          %s218 = smul.addr %s20, 8
          %s219 = scalar_lea.hbm %s0, %s218
          %s221 = sshll.u32 %s219, 4
          %s222 = int_to_ptr.hbm [resolvable:$true] %s221
          %s223 = sshll.u32 %s215, 4
          %s224 = int_to_ptr.vmem [resolvable:$true] %s223
          %226 = dma.hbm_to_vmem [thread:$0]  %s222, 128, %s224, %s212
        $region36: #{tpu_custom_call.1} parent=31 // pred_fallthru
          _
      $region32: #{tpu_custom_call.1} parent=5 // pred_fallthru
        _
      %p227 = scmp.le.s32.totalorder 1, %s20
      %p228 = scmp.lt.s32.totalorder %s20, 3
      %p229 = pnand %p227, %p228
      %p230 = pneg %p229
      // Predicated region
      $region37: #{tpu_custom_call.1} parent=5 // pred_check
        _
      $region38: #{tpu_custom_call.1} parent=5 // pred_check_branch
        %232 = sbr.rel (%p229) target = $region40
      $region39: #{tpu_custom_call.1} parent=5 // pred_region
        %s233 = ssub.s32 %s20, 1
        %s234 = sand.u32 %s33, 1
        %s235 = scalar_lea.sflag [#allocation4], %s234
        %s236 = sand.u32 %s33, 1
        %s237 = smul.addr %s236, 8
        %s238 = scalar_lea.vmem [#allocation3], %s237
        // Predicated region
        $region41: #{tpu_custom_call.1} parent=39 // pred_check
          %p239 = pneg %p46
        $region42: #{tpu_custom_call.1} parent=39 // pred_check_branch
          %241 = sbr.rel (%p239) target = $region44
        $region43: #{tpu_custom_call.1} parent=39 // pred_region
          %243 = dma.done %s235, 128
        $region44: #{tpu_custom_call.1} parent=39 // pred_fallthru
          _
        // Predicated region
        $region45: #{tpu_custom_call.1} parent=39 // pred_check
          %p244 = pneg %p67
        $region46: #{tpu_custom_call.1} parent=39 // pred_check_branch
          %246 = sbr.rel (%p244) target = $region48
        $region47: #{tpu_custom_call.1} parent=39 // pred_region
          %248 = dma.done [#allocation6], 16
        $region48: #{tpu_custom_call.1} parent=39 // pred_fallthru
          _
        // Predicated region
        $region49: #{tpu_custom_call.1} parent=39 // pred_check
          %p249 = pneg %p88
        $region50: #{tpu_custom_call.1} parent=39 // pred_check_branch
          %251 = sbr.rel (%p249) target = $region52
        $region51: #{tpu_custom_call.1} parent=39 // pred_region
          %253 = dma.done [#allocation9], 16
        $region52: #{tpu_custom_call.1} parent=39 // pred_fallthru
          _
        // Predicated region
        $region53: #{tpu_custom_call.1} parent=39 // pred_check
          %p254 = pneg %p109
        $region54: #{tpu_custom_call.1} parent=39 // pred_check_branch
          %256 = sbr.rel (%p254) target = $region56
        $region55: #{tpu_custom_call.1} parent=39 // pred_region
          %258 = dma.done [#allocation9], 16
        $region56: #{tpu_custom_call.1} parent=39 // pred_fallthru
          _
        %259 = sfence
        %s260 = sand.u32 %s33, 1
        %s261 = scalar_lea.sflag [#allocation4], %s260
        %s262 = sand.u32 %s33, 1
        %s263 = smul.addr %s262, 8
        %s264 = scalar_lea.vmem [#allocation3], %s263
        %p265 = pneg %p46
        %p266 = pneg %p43
        %p267 = pneg %p67
        %p268 = pneg %p64
        %p269 = pneg %p88
        %p270 = pneg %p85
        %p271 = pneg %p109
        %p272 = pneg %p106
        %p273 = pneg %p130
        %p274 = pneg %p127
        %p275 = pneg %p156
        %p276 = pneg %p153
        %s277 = sand.u32 %s143, 1
        %s278 = scalar_lea.sflag [#allocation5], %s277
        %s279 = sand.u32 %s143, 1
        %s280 = smul.addr %s279, 8
        %s281 = scalar_lea.vmem [#allocation11], %s280
        %v282 = vld [vmem:[%s238] sm:$0xff]
        %s283 = sld [smem:[#allocation7]]
        %v284 = vstv %s283
        %v285 = vmul.f32 %v282, %v284
        %s286 = sld [smem:[#allocation8]]
        %v287 = vstv %s286
        %v288 = vadd.f32 %v285, %v287
        %v289 = vmax.f32 %v288, 0.0
        %s290 = sld [smem:[#allocation10]]
        %v291 = vstv %s290
        %v292 = vmul.f32 %v289, %v291
        %v293 = vadd.f32 %v292, 0.0
        %s294 = sld [smem:[#allocation7 + $0x1]]
        %v295 = vstv %s294
        %v296 = vmul.f32 %v282, %v295
        %s297 = sld [smem:[#allocation8 + $0x1]]
        %v298 = vstv %s297
        %v299 = vadd.f32 %v296, %v298
        %v300 = vmax.f32 %v299, 0.0
        %s301 = sld [smem:[#allocation10 + $0x1]]
        %v302 = vstv %s301
        %v303 = vmul.f32 %v300, %v302
        %v304 = vadd.f32 %v293, %v303
        %s305 = sld [smem:[#allocation7 + $0x2]]
        %v306 = vstv %s305
        %v307 = vmul.f32 %v282, %v306
        %s308 = sld [smem:[#allocation8 + $0x2]]
        %v309 = vstv %s308
        %v310 = vadd.f32 %v307, %v309
        %v311 = vmax.f32 %v310, 0.0
        %s312 = sld [smem:[#allocation10 + $0x2]]
        %v313 = vstv %s312
        %v314 = vmul.f32 %v311, %v313
        %v315 = vadd.f32 %v304, %v314
        %s316 = sld [smem:[#allocation7 + $0x3]]
        %v317 = vstv %s316
        %v318 = vmul.f32 %v282, %v317
        %s319 = sld [smem:[#allocation8 + $0x3]]
        %v320 = vstv %s319
        %v321 = vadd.f32 %v318, %v320
        %v322 = vmax.f32 %v321, 0.0
        %s323 = sld [smem:[#allocation10 + $0x3]]
        %v324 = vstv %s323
        %v325 = vmul.f32 %v322, %v324
        %v326 = vadd.f32 %v315, %v325
        %s327 = sld [smem:[#allocation7 + $0x4]]
        %v328 = vstv %s327
        %v329 = vmul.f32 %v282, %v328
        %s330 = sld [smem:[#allocation8 + $0x4]]
        %v331 = vstv %s330
        %v332 = vadd.f32 %v329, %v331
        %v333 = vmax.f32 %v332, 0.0
        %s334 = sld [smem:[#allocation10 + $0x4]]
        %v335 = vstv %s334
        %v336 = vmul.f32 %v333, %v335
        %v337 = vadd.f32 %v326, %v336
        %s338 = sld [smem:[#allocation7 + $0x5]]
        %v339 = vstv %s338
        %v340 = vmul.f32 %v282, %v339
        %s341 = sld [smem:[#allocation8 + $0x5]]
        %v342 = vstv %s341
        %v343 = vadd.f32 %v340, %v342
        %v344 = vmax.f32 %v343, 0.0
        %s345 = sld [smem:[#allocation10 + $0x5]]
        %v346 = vstv %s345
        %v347 = vmul.f32 %v344, %v346
        %v348 = vadd.f32 %v337, %v347
        %s349 = sld [smem:[#allocation7 + $0x6]]
        %v350 = vstv %s349
        %v351 = vmul.f32 %v282, %v350
        %s352 = sld [smem:[#allocation8 + $0x6]]
        %v353 = vstv %s352
        %v354 = vadd.f32 %v351, %v353
        %v355 = vmax.f32 %v354, 0.0
        %s356 = sld [smem:[#allocation10 + $0x6]]
        %v357 = vstv %s356
        %v358 = vmul.f32 %v355, %v357
        %v359 = vadd.f32 %v348, %v358
        %s360 = sld [smem:[#allocation7 + $0x7]]
        %v361 = vstv %s360
        %v362 = vmul.f32 %v282, %v361
        %s363 = sld [smem:[#allocation8 + $0x7]]
        %v364 = vstv %s363
        %v365 = vadd.f32 %v362, %v364
        %v366 = vmax.f32 %v365, 0.0
        %s367 = sld [smem:[#allocation10 + $0x7]]
        %v368 = vstv %s367
        %v369 = vmul.f32 %v366, %v368
        %v370 = vadd.f32 %v359, %v369
        %s371 = sld [smem:[#allocation7 + $0x8]]
        %v372 = vstv %s371
        %v373 = vmul.f32 %v282, %v372
        %s374 = sld [smem:[#allocation8 + $0x8]]
        %v375 = vstv %s374
        %v376 = vadd.f32 %v373, %v375
        %v377 = vmax.f32 %v376, 0.0
        %s378 = sld [smem:[#allocation10 + $0x8]]
        %v379 = vstv %s378
        %v380 = vmul.f32 %v377, %v379
        %v381 = vadd.f32 %v370, %v380
        %s382 = sld [smem:[#allocation7 + $0x9]]
        %v383 = vstv %s382
        %v384 = vmul.f32 %v282, %v383
        %s385 = sld [smem:[#allocation8 + $0x9]]
        %v386 = vstv %s385
        %v387 = vadd.f32 %v384, %v386
        %v388 = vmax.f32 %v387, 0.0
        %s389 = sld [smem:[#allocation10 + $0x9]]
        %v390 = vstv %s389
        %v391 = vmul.f32 %v388, %v390
        %v392 = vadd.f32 %v381, %v391
        %s393 = sld [smem:[#allocation7 + $0xa]]
        %v394 = vstv %s393
        %v395 = vmul.f32 %v282, %v394
        %s396 = sld [smem:[#allocation8 + $0xa]]
        %v397 = vstv %s396
        %v398 = vadd.f32 %v395, %v397
        %v399 = vmax.f32 %v398, 0.0
        %s400 = sld [smem:[#allocation10 + $0xa]]
        %v401 = vstv %s400
        %v402 = vmul.f32 %v399, %v401
        %v403 = vadd.f32 %v392, %v402
        %s404 = sld [smem:[#allocation7 + $0xb]]
        %v405 = vstv %s404
        %v406 = vmul.f32 %v282, %v405
        %s407 = sld [smem:[#allocation8 + $0xb]]
        %v408 = vstv %s407
        %v409 = vadd.f32 %v406, %v408
        %v410 = vmax.f32 %v409, 0.0
        %s411 = sld [smem:[#allocation10 + $0xb]]
        %v412 = vstv %s411
        %v413 = vmul.f32 %v410, %v412
        %v414 = vadd.f32 %v403, %v413
        %s415 = sld [smem:[#allocation7 + $0xc]]
        %v416 = vstv %s415
        %v417 = vmul.f32 %v282, %v416
        %s418 = sld [smem:[#allocation8 + $0xc]]
        %v419 = vstv %s418
        %v420 = vadd.f32 %v417, %v419
        %v421 = vmax.f32 %v420, 0.0
        %s422 = sld [smem:[#allocation10 + $0xc]]
        %v423 = vstv %s422
        %v424 = vmul.f32 %v421, %v423
        %v425 = vadd.f32 %v414, %v424
        %s426 = sld [smem:[#allocation7 + $0xd]]
        %v427 = vstv %s426
        %v428 = vmul.f32 %v282, %v427
        %s429 = sld [smem:[#allocation8 + $0xd]]
        %v430 = vstv %s429
        %v431 = vadd.f32 %v428, %v430
        %v432 = vmax.f32 %v431, 0.0
        %s433 = sld [smem:[#allocation10 + $0xd]]
        %v434 = vstv %s433
        %v435 = vmul.f32 %v432, %v434
        %v436 = vadd.f32 %v425, %v435
        %s437 = sld [smem:[#allocation7 + $0xe]]
        %v438 = vstv %s437
        %v439 = vmul.f32 %v282, %v438
        %s440 = sld [smem:[#allocation8 + $0xe]]
        %v441 = vstv %s440
        %v442 = vadd.f32 %v439, %v441
        %v443 = vmax.f32 %v442, 0.0
        %s444 = sld [smem:[#allocation10 + $0xe]]
        %v445 = vstv %s444
        %v446 = vmul.f32 %v443, %v445
        %v447 = vadd.f32 %v436, %v446
        %s448 = sld [smem:[#allocation7 + $0xf]]
        %v449 = vstv %s448
        %v450 = vmul.f32 %v282, %v449
        %s451 = sld [smem:[#allocation8 + $0xf]]
        %v452 = vstv %s451
        %v453 = vadd.f32 %v450, %v452
        %v454 = vmax.f32 %v453, 0.0
        %s455 = sld [smem:[#allocation10 + $0xf]]
        %v456 = vstv %s455
        %v457 = vmul.f32 %v454, %v456
        %v458 = vadd.f32 %v447, %v457
        %s459 = sld [smem:[#allocation7 + $0x10]]
        %v460 = vstv %s459
        %v461 = vmul.f32 %v282, %v460
        %s462 = sld [smem:[#allocation8 + $0x10]]
        %v463 = vstv %s462
        %v464 = vadd.f32 %v461, %v463
        %v465 = vmax.f32 %v464, 0.0
        %s466 = sld [smem:[#allocation10 + $0x10]]
        %v467 = vstv %s466
        %v468 = vmul.f32 %v465, %v467
        %v469 = vadd.f32 %v458, %v468
        %s470 = sld [smem:[#allocation7 + $0x11]]
        %v471 = vstv %s470
        %v472 = vmul.f32 %v282, %v471
        %s473 = sld [smem:[#allocation8 + $0x11]]
        %v474 = vstv %s473
        %v475 = vadd.f32 %v472, %v474
        %v476 = vmax.f32 %v475, 0.0
        %s477 = sld [smem:[#allocation10 + $0x11]]
        %v478 = vstv %s477
        %v479 = vmul.f32 %v476, %v478
        %v480 = vadd.f32 %v469, %v479
        %s481 = sld [smem:[#allocation7 + $0x12]]
        %v482 = vstv %s481
        %v483 = vmul.f32 %v282, %v482
        %s484 = sld [smem:[#allocation8 + $0x12]]
        %v485 = vstv %s484
        %v486 = vadd.f32 %v483, %v485
        %v487 = vmax.f32 %v486, 0.0
        %s488 = sld [smem:[#allocation10 + $0x12]]
        %v489 = vstv %s488
        %v490 = vmul.f32 %v487, %v489
        %v491 = vadd.f32 %v480, %v490
        %s492 = sld [smem:[#allocation7 + $0x13]]
        %v493 = vstv %s492
        %v494 = vmul.f32 %v282, %v493
        %s495 = sld [smem:[#allocation8 + $0x13]]
        %v496 = vstv %s495
        %v497 = vadd.f32 %v494, %v496
        %v498 = vmax.f32 %v497, 0.0
        %s499 = sld [smem:[#allocation10 + $0x13]]
        %v500 = vstv %s499
        %v501 = vmul.f32 %v498, %v500
        %v502 = vadd.f32 %v491, %v501
        %s503 = sld [smem:[#allocation7 + $0x14]]
        %v504 = vstv %s503
        %v505 = vmul.f32 %v282, %v504
        %s506 = sld [smem:[#allocation8 + $0x14]]
        %v507 = vstv %s506
        %v508 = vadd.f32 %v505, %v507
        %v509 = vmax.f32 %v508, 0.0
        %s510 = sld [smem:[#allocation10 + $0x14]]
        %v511 = vstv %s510
        %v512 = vmul.f32 %v509, %v511
        %v513 = vadd.f32 %v502, %v512
        %s514 = sld [smem:[#allocation7 + $0x15]]
        %v515 = vstv %s514
        %v516 = vmul.f32 %v282, %v515
        %s517 = sld [smem:[#allocation8 + $0x15]]
        %v518 = vstv %s517
        %v519 = vadd.f32 %v516, %v518
        %v520 = vmax.f32 %v519, 0.0
        %s521 = sld [smem:[#allocation10 + $0x15]]
        %v522 = vstv %s521
        %v523 = vmul.f32 %v520, %v522
        %v524 = vadd.f32 %v513, %v523
        %s525 = sld [smem:[#allocation7 + $0x16]]
        %v526 = vstv %s525
        %v527 = vmul.f32 %v282, %v526
        %s528 = sld [smem:[#allocation8 + $0x16]]
        %v529 = vstv %s528
        %v530 = vadd.f32 %v527, %v529
        %v531 = vmax.f32 %v530, 0.0
        %s532 = sld [smem:[#allocation10 + $0x16]]
        %v533 = vstv %s532
        %v534 = vmul.f32 %v531, %v533
        %v535 = vadd.f32 %v524, %v534
        %s536 = sld [smem:[#allocation7 + $0x17]]
        %v537 = vstv %s536
        %v538 = vmul.f32 %v282, %v537
        %s539 = sld [smem:[#allocation8 + $0x17]]
        %v540 = vstv %s539
        %v541 = vadd.f32 %v538, %v540
        %v542 = vmax.f32 %v541, 0.0
        %s543 = sld [smem:[#allocation10 + $0x17]]
        %v544 = vstv %s543
        %v545 = vmul.f32 %v542, %v544
        %v546 = vadd.f32 %v535, %v545
        %s547 = sld [smem:[#allocation7 + $0x18]]
        %v548 = vstv %s547
        %v549 = vmul.f32 %v282, %v548
        %s550 = sld [smem:[#allocation8 + $0x18]]
        %v551 = vstv %s550
        %v552 = vadd.f32 %v549, %v551
        %v553 = vmax.f32 %v552, 0.0
        %s554 = sld [smem:[#allocation10 + $0x18]]
        %v555 = vstv %s554
        %v556 = vmul.f32 %v553, %v555
        %v557 = vadd.f32 %v546, %v556
        %s558 = sld [smem:[#allocation7 + $0x19]]
        %v559 = vstv %s558
        %v560 = vmul.f32 %v282, %v559
        %s561 = sld [smem:[#allocation8 + $0x19]]
        %v562 = vstv %s561
        %v563 = vadd.f32 %v560, %v562
        %v564 = vmax.f32 %v563, 0.0
        %s565 = sld [smem:[#allocation10 + $0x19]]
        %v566 = vstv %s565
        %v567 = vmul.f32 %v564, %v566
        %v568 = vadd.f32 %v557, %v567
        %s569 = sld [smem:[#allocation7 + $0x1a]]
        %v570 = vstv %s569
        %v571 = vmul.f32 %v282, %v570
        %s572 = sld [smem:[#allocation8 + $0x1a]]
        %v573 = vstv %s572
        %v574 = vadd.f32 %v571, %v573
        %v575 = vmax.f32 %v574, 0.0
        %s576 = sld [smem:[#allocation10 + $0x1a]]
        %v577 = vstv %s576
        %v578 = vmul.f32 %v575, %v577
        %v579 = vadd.f32 %v568, %v578
        %s580 = sld [smem:[#allocation7 + $0x1b]]
        %v581 = vstv %s580
        %v582 = vmul.f32 %v282, %v581
        %s583 = sld [smem:[#allocation8 + $0x1b]]
        %v584 = vstv %s583
        %v585 = vadd.f32 %v582, %v584
        %v586 = vmax.f32 %v585, 0.0
        %s587 = sld [smem:[#allocation10 + $0x1b]]
        %v588 = vstv %s587
        %v589 = vmul.f32 %v586, %v588
        %v590 = vadd.f32 %v579, %v589
        %s591 = sld [smem:[#allocation7 + $0x1c]]
        %v592 = vstv %s591
        %v593 = vmul.f32 %v282, %v592
        %s594 = sld [smem:[#allocation8 + $0x1c]]
        %v595 = vstv %s594
        %v596 = vadd.f32 %v593, %v595
        %v597 = vmax.f32 %v596, 0.0
        %s598 = sld [smem:[#allocation10 + $0x1c]]
        %v599 = vstv %s598
        %v600 = vmul.f32 %v597, %v599
        %v601 = vadd.f32 %v590, %v600
        %s602 = sld [smem:[#allocation7 + $0x1d]]
        %v603 = vstv %s602
        %v604 = vmul.f32 %v282, %v603
        %s605 = sld [smem:[#allocation8 + $0x1d]]
        %v606 = vstv %s605
        %v607 = vadd.f32 %v604, %v606
        %v608 = vmax.f32 %v607, 0.0
        %s609 = sld [smem:[#allocation10 + $0x1d]]
        %v610 = vstv %s609
        %v611 = vmul.f32 %v608, %v610
        %v612 = vadd.f32 %v601, %v611
        %s613 = sld [smem:[#allocation7 + $0x1e]]
        %v614 = vstv %s613
        %v615 = vmul.f32 %v282, %v614
        %s616 = sld [smem:[#allocation8 + $0x1e]]
        %v617 = vstv %s616
        %v618 = vadd.f32 %v615, %v617
        %v619 = vmax.f32 %v618, 0.0
        %s620 = sld [smem:[#allocation10 + $0x1e]]
        %v621 = vstv %s620
        %v622 = vmul.f32 %v619, %v621
        %v623 = vadd.f32 %v612, %v622
        %s624 = sld [smem:[#allocation7 + $0x1f]]
        %v625 = vstv %s624
        %v626 = vmul.f32 %v282, %v625
        %s627 = sld [smem:[#allocation8 + $0x1f]]
        %v628 = vstv %s627
        %v629 = vadd.f32 %v626, %v628
        %v630 = vmax.f32 %v629, 0.0
        %s631 = sld [smem:[#allocation10 + $0x1f]]
        %v632 = vstv %s631
        %v633 = vmul.f32 %v630, %v632
        %v634 = vadd.f32 %v623, %v633
        %s635 = sld [smem:[#allocation2]]
        %v636 = vstv %s635
        %v637 = vadd.f32 %v634, %v636
        %638 = vst [vmem:[%s281] sm:$0xff] %v637
        %s639 = sand.u32 %s143, 1
        %s640 = scalar_lea.sflag [#allocation5], %s639
        %s641 = sand.u32 %s143, 1
        %s642 = smul.addr %s641, 8
        %s643 = scalar_lea.vmem [#allocation11], %s642
        // Predicated region
        $region57: #{tpu_custom_call.1} parent=39 // pred_check
          %p644 = pneg %p153
        $region58: #{tpu_custom_call.1} parent=39 // pred_check_branch
          %646 = sbr.rel (%p644) target = $region60
        $region59: #{tpu_custom_call.1} parent=39 // pred_region
          %648 = vsyncadd %s640, 0
          %s649 = smul.addr %s25, 8
          %s650 = scalar_lea.hbm %s5, %s649
          %s652 = sshll.u32 %s643, 4
          %s653 = int_to_ptr.vmem [resolvable:$true] %s652
          %s654 = sshll.u32 %s650, 4
          %s655 = int_to_ptr.hbm [resolvable:$true] %s654
          %657 = dma.vmem_to_hbm [thread:$0]  %s653, 128, %s655, %s640
        $region60: #{tpu_custom_call.1} parent=39 // pred_fallthru
          _
      $region40: #{tpu_custom_call.1} parent=5 // pred_fallthru
        _
      %p658 = scmp.le.s32.totalorder 2, %s20
      // Predicated region
      $region61: #{tpu_custom_call.1} parent=5 // pred_check
        %p659 = pneg %p658
      $region62: #{tpu_custom_call.1} parent=5 // pred_check_branch
        %661 = sbr.rel (%p659) target = $region64
      $region63: #{tpu_custom_call.1} parent=5 // pred_region
        %s662 = ssub.s32 %s20, 2
        // Predicated region
        $region65: #{tpu_custom_call.1} parent=63 // pred_check
          %p663 = pneg %p159
        $region66: #{tpu_custom_call.1} parent=63 // pred_check_branch
          %665 = sbr.rel (%p663) target = $region68
        $region67: #{tpu_custom_call.1} parent=63 // pred_region
          %s666 = sand.u32 %s144, 1
          %s667 = scalar_lea.sflag [#allocation5], %s666
          %s668 = sand.u32 %s144, 1
          %s669 = smul.addr %s668, 8
          %s670 = scalar_lea.vmem [#allocation11], %s669
          %672 = dma.done %s667, 128
        $region68: #{tpu_custom_call.1} parent=63 // pred_fallthru
          _
      $region64: #{tpu_custom_call.1} parent=5 // pred_fallthru
        _
    $region6: #{tpu_custom_call.1} parent=1 // loop_footer
      %s24 = sadd.s32 1, %s20
    $region7: #{tpu_custom_call.1} parent=1 // loop_footer_branch
      %19 = sbr.rel target = $region3
    $region8: #{tpu_custom_call.1} parent=1 // loop_exit
      _
    %673 = vsyncpa [#allocation4], 1
    %s674 = scalar_lea.sflag [#allocation4], 1
    %675 = vsyncpa %s674, 1
    %676 = vsyncpa [#allocation5], 1
    %s677 = scalar_lea.sflag [#allocation5], 1
    %678 = vsyncpa %s677, 1
    %679 = vsyncpa [#allocation6], 1
    %s680 = scalar_lea.sflag [#allocation6], 1
    %681 = vsyncpa %s680, 1
    %682 = vsyncpa [#allocation9], 1

</llo_original>
